<compile_context>
chip_gen: v7x
topology: tpu7x:2x2x1
jax: 0.10.0
libtpu: 0.0.40
codegen_flags: <defaults>
</compile_context>

<pallas_src>
import functools
import math

import jax
import jax.numpy as jnp
from jax.experimental import pallas as pl
from jax.experimental.pallas import tpu as pltpu


def roberta_output_kernel(x_ref, w_ref, b_ref, res_ref, gamma_ref, beta_ref,
                          o_ref, acc_ref, *, eps):
    k = pl.program_id(1)
    nk = pl.num_programs(1)

    # Zero the accumulator on the first K step of this row tile.
    @pl.when(k == 0)
    def _():
        acc_ref[...] = jnp.zeros_like(acc_ref)

    # Partial matmul: (tm, tk) @ (tk, H), accumulate in f32 on the MXU.
    acc_ref[...] += jnp.dot(x_ref[...], w_ref[...],
                            preferred_element_type=jnp.float32)

    # Epilogue on the last K step: bias + residual + LayerNorm, then store.
    @pl.when(k == nk - 1)
    def _():
        y = (acc_ref[...]
             + b_ref[...].astype(jnp.float32)       # bias broadcast over rows
             + res_ref[...].astype(jnp.float32))    # residual add
        # Dropout = identity at inference (hidden_dropout_prob ignored).
        # One-pass LayerNorm stats: var = E[y^2] - mean^2.
        mean = jnp.mean(y, axis=-1, keepdims=True)
        mean_sq = jnp.mean(y * y, axis=-1, keepdims=True)
        var = mean_sq - mean * mean
        norm = (y - mean) * jax.lax.rsqrt(var + eps)
        out = (norm * gamma_ref[...].astype(jnp.float32)
               + beta_ref[...].astype(jnp.float32))
        o_ref[...] = out.astype(o_ref.dtype)


def roberta_output(hidden_states, input_tensor, weight, bias, gamma, beta,
                   *, eps=1e-12, row_tile=256, k_tile=512, matmul_dtype=None):
    """hidden_states: (M, K)  input_tensor: (M, H)  weight: (K, H)
       bias/gamma/beta: (H,)  returns (M, H) in hidden_states' dtype.

    matmul_dtype: optionally cast x/W (e.g. jnp.bfloat16) for the MXU; the
    accumulation and the LayerNorm math stay in f32.
    """
    M, K = hidden_states.shape
    H = input_tensor.shape[-1]
    out_dtype = hidden_states.dtype

    if matmul_dtype is not None:
        hidden_states = hidden_states.astype(matmul_dtype)
        weight = weight.astype(matmul_dtype)

    tm = min(row_tile, M)
    tk = min(k_tile, K)
    assert M % tm == 0, "rows must be divisible by the row tile"
    assert K % tk == 0, "contraction dim must be divisible by the K tile"

    # Present 1-D params as (1, H) rows so they land lane-dense in VMEM.
    bias2 = bias.reshape(1, H)
    gamma2 = gamma.reshape(1, H)
    beta2 = beta.reshape(1, H)

    grid = (M // tm, K // tk)
    kernel = functools.partial(roberta_output_kernel, eps=eps)

    # VMEM budget for this tile plan (double-buffered inputs/outputs + scratch).
    x_item = jnp.dtype(hidden_states.dtype).itemsize
    r_item = jnp.dtype(input_tensor.dtype).itemsize
    o_item = jnp.dtype(out_dtype).itemsize
    p_item = jnp.dtype(bias.dtype).itemsize
    vmem_est = (2 * tm * tk * x_item        # x tile
                + 2 * tk * H * x_item       # weight tile
                + 2 * tm * H * r_item       # residual tile
                + 2 * tm * H * o_item       # output tile
                + 2 * 3 * H * p_item        # bias / gamma / beta
                + tm * H * 4)               # f32 accumulator scratch
    vmem_limit = int(min(max(2 * vmem_est, 32 * 1024 * 1024),
                         96 * 1024 * 1024))

    return pl.pallas_call(
        kernel,
        out_shape=jax.ShapeDtypeStruct((M, H), out_dtype),
        grid_spec=pltpu.PrefetchScalarGridSpec(
            num_scalar_prefetch=0,
            grid=grid,
            in_specs=[
                pl.BlockSpec((tm, tk), lambda i, k: (i, k)),   # x tile
                pl.BlockSpec((tk, H),  lambda i, k: (k, 0)),   # dense weight
                pl.BlockSpec((1, H),   lambda i, k: (0, 0)),   # dense bias
                pl.BlockSpec((tm, H),  lambda i, k: (i, 0)),   # residual tile
                pl.BlockSpec((1, H),   lambda i, k: (0, 0)),   # LN gamma
                pl.BlockSpec((1, H),   lambda i, k: (0, 0)),   # LN beta
            ],
            out_specs=pl.BlockSpec((tm, H), lambda i, k: (i, 0)),
            scratch_shapes=[pltpu.VMEM((tm, H), jnp.float32)],
        ),
        compiler_params=pltpu.CompilerParams(
            dimension_semantics=("parallel", "arbitrary"),
            vmem_limit_bytes=vmem_limit),
    )(hidden_states, weight, bias2, input_tensor, gamma2, beta2)


def reference(hidden_states, input_tensor, weight, bias, gamma, beta, eps=1e-12):
    h = hidden_states.astype(jnp.float32) @ weight.astype(jnp.float32) + bias
    y = h + input_tensor.astype(jnp.float32)
    mean = jnp.mean(y, axis=-1, keepdims=True)
    var = jnp.mean((y - mean) ** 2, axis=-1, keepdims=True)
    return ((y - mean) * jax.lax.rsqrt(var + eps)) * gamma + beta


def _make_inputs(key, M, K, H):
    k1, k2, k3, k4, k5, k6 = jax.random.split(key, 6)
    hidden_states = jax.random.normal(k1, (M, K), jnp.float32)
    input_tensor = jax.random.normal(k2, (M, H), jnp.float32)
    w_scale = 1.0 / jnp.sqrt(jnp.float32(K))
    weight = jax.random.uniform(k3, (K, H), jnp.float32, -w_scale, w_scale)
    bias = jax.random.uniform(k4, (H,), jnp.float32, -w_scale, w_scale)
    gamma = 1.0 + 0.1 * jax.random.normal(k5, (H,), jnp.float32)
    beta = 0.1 * jax.random.normal(k6, (H,), jnp.float32)
    return hidden_states, input_tensor, weight, bias, gamma, beta


if __name__ == "__main__":
    eps = 1e-12
    key = jax.random.PRNGKey(0)
    key_small, key_big = jax.random.split(key, 2)

    # --- Test 1: small config (batch=2, seq=8, intermediate=64, hidden=32),
    #             f32 end-to-end, tight tolerance. ---------------------------
    batch, seq = 2, 8
    intermediate_size, hidden_size = 64, 32
    hs, res, w, b, g, bt = _make_inputs(key_small, batch * seq,
                                        intermediate_size, hidden_size)
    out = roberta_output(hs, res, w, b, g, bt, eps=eps)
    out = jax.block_until_ready(out)
    ref = reference(hs, res, w, b, g, bt, eps)
    assert out.shape == (batch * seq, hidden_size)
    assert jnp.allclose(out, ref, atol=1e-5, rtol=1e-5), "mismatch (f32 small)"

    # --- Test 2: lane-dense config exercising K-tiling, multiple row tiles
    #             and the bf16 MXU path (f32 accumulation). ------------------
    batch2, seq2 = 2, 128
    intermediate2, hidden2 = 512, 256
    hs2, res2, w2, b2, g2, bt2 = _make_inputs(key_big, batch2 * seq2,
                                              intermediate2, hidden2)
    hs2_bf = hs2.astype(jnp.bfloat16)
    res2_bf = res2.astype(jnp.bfloat16)
    out2 = roberta_output(hs2_bf, res2_bf, w2, b2, g2, bt2, eps=eps,
                          row_tile=128, k_tile=256,
                          matmul_dtype=jnp.bfloat16)
    out2 = jax.block_until_ready(out2)
    ref2 = reference(hs2, res2, w2, b2, g2, bt2, eps)
    assert out2.shape == (batch2 * seq2, hidden2)
    assert jnp.allclose(out2.astype(jnp.float32), ref2,
                        atol=5e-2, rtol=5e-2), "mismatch (bf16 tiled)"

    print("KERNEL_OK")
</pallas_src>

<mosaic_0001>
module attributes {stable_mosaic.version = 11 : i64} {
  func.func @roberta_output_kernel(%arg0: i32, %arg1: i32, %arg2: memref<16x64xf32, #tpu.memory_space<vmem>>, %arg3: memref<64x32xf32, #tpu.memory_space<vmem>>, %arg4: memref<1x32xf32, #tpu.memory_space<vmem>>, %arg5: memref<16x32xf32, #tpu.memory_space<vmem>>, %arg6: memref<1x32xf32, #tpu.memory_space<vmem>>, %arg7: memref<1x32xf32, #tpu.memory_space<vmem>>, %arg8: memref<16x32xf32, #tpu.memory_space<vmem>>, %arg9: memref<16x32xf32, #tpu.memory_space<vmem>>) attributes {dimension_semantics = [#tpu.dimension_semantics<parallel>, #tpu.dimension_semantics<arbitrary>], iteration_bounds = array<i64: 1, 1>, scalar_prefetch = 0 : i64, scratch_operands = 1 : i64, tpu.core_type = #tpu.core_type<tc>, window_params = [{transform_indices = @transform_0, window_bounds = array<i64: 16, 64>}, {transform_indices = @transform_1, window_bounds = array<i64: 64, 32>}, {pipeline_mode = #tpu.pipeline_mode<synchronous>, transform_indices = @transform_2, window_bounds = array<i64: 1, 32>}, {transform_indices = @transform_3, window_bounds = array<i64: 16, 32>}, {pipeline_mode = #tpu.pipeline_mode<synchronous>, transform_indices = @transform_4, window_bounds = array<i64: 1, 32>}, {pipeline_mode = #tpu.pipeline_mode<synchronous>, transform_indices = @transform_5, window_bounds = array<i64: 1, 32>}, {transform_indices = @transform_6, window_bounds = array<i64: 16, 32>}]} {
    %c0_i32 = arith.constant 0 : i32
    %0 = arith.cmpi eq, %arg1, %c0_i32 : i32
    %1 = arith.extui %0 : i1 to i32
    %c0_i32_0 = arith.constant 0 : i32
    %2 = arith.cmpi ne, %1, %c0_i32_0 : i32
    scf.if %2 {
      %cst_10 = arith.constant 0.000000e+00 : f32
      %12 = vector.broadcast %cst_10 : f32 to vector<16x32xf32>
      %c0_11 = arith.constant 0 : index
      %c0_12 = arith.constant 0 : index
      %13 = vector.load %arg9[%c0_11, %c0_12] : memref<16x32xf32, #tpu.memory_space<vmem>>, vector<16x32xf32>
      tpu.vector_store %arg9[%c0_11, %c0_12], %12 {strides = array<i32>} : memref<16x32xf32, #tpu.memory_space<vmem>>, vector<16x32xf32>,
    } else {
    }
    %c0 = arith.constant 0 : index
    %c0_1 = arith.constant 0 : index
    %3 = vector.load %arg9[%c0, %c0_1] : memref<16x32xf32, #tpu.memory_space<vmem>>, vector<16x32xf32>
    %c0_2 = arith.constant 0 : index
    %c0_3 = arith.constant 0 : index
    %4 = vector.load %arg2[%c0_2, %c0_3] : memref<16x64xf32, #tpu.memory_space<vmem>>, vector<16x64xf32>
    %c0_4 = arith.constant 0 : index
    %c0_5 = arith.constant 0 : index
    %5 = vector.load %arg3[%c0_4, %c0_5] : memref<64x32xf32, #tpu.memory_space<vmem>>, vector<64x32xf32>
    %cst = arith.constant dense<0.000000e+00> : vector<16x32xf32>
    %6 = tpu.matmul %4, %5, %cst {dimension_numbers = #tpu.dot_dimension_numbers<[1], [0], [0], [1], [0, 0, 1, 1], [], []>} : vector<16x64xf32>, vector<64x32xf32>, vector<16x32xf32> -> vector<16x32xf32>
    %7 = arith.addf %3, %6 : vector<16x32xf32>
    %c0_6 = arith.constant 0 : index
    %c0_7 = arith.constant 0 : index
    %8 = vector.load %arg9[%c0_6, %c0_7] : memref<16x32xf32, #tpu.memory_space<vmem>>, vector<16x32xf32>
    tpu.vector_store %arg9[%c0_6, %c0_7], %7 {strides = array<i32>} : memref<16x32xf32, #tpu.memory_space<vmem>>, vector<16x32xf32>,
    %c0_i32_8 = arith.constant 0 : i32
    %9 = arith.cmpi eq, %arg1, %c0_i32_8 : i32
    %10 = arith.extui %9 : i1 to i32
    %c0_i32_9 = arith.constant 0 : i32
    %11 = arith.cmpi ne, %10, %c0_i32_9 : i32
    scf.if %11 {
      %c0_10 = arith.constant 0 : index
      %c0_11 = arith.constant 0 : index
      %12 = vector.load %arg9[%c0_10, %c0_11] : memref<16x32xf32, #tpu.memory_space<vmem>>, vector<16x32xf32>
      %c0_12 = arith.constant 0 : index
      %c0_13 = arith.constant 0 : index
      %13 = vector.load %arg4[%c0_12, %c0_13] : memref<1x32xf32, #tpu.memory_space<vmem>>, vector<1x32xf32>
      %14 = vector.broadcast %13 : vector<1x32xf32> to vector<16x32xf32>
      %15 = arith.addf %12, %14 : vector<16x32xf32>
      %c0_14 = arith.constant 0 : index
      %c0_15 = arith.constant 0 : index
      %16 = vector.load %arg5[%c0_14, %c0_15] : memref<16x32xf32, #tpu.memory_space<vmem>>, vector<16x32xf32>
      %17 = arith.addf %15, %16 : vector<16x32xf32>
      %cst_16 = arith.constant dense<0.000000e+00> : vector<16xf32>
      %18 = vector.multi_reduction <add>, %17, %cst_16 [1] : vector<16x32xf32> to vector<16xf32>
      %19 = vector.shape_cast %18 : vector<16xf32> to vector<16x1xf32>
      %cst_17 = arith.constant 3.200000e+01 : f32
      %20 = vector.broadcast %cst_17 : f32 to vector<16x1xf32>
      %21 = arith.divf %19, %20 : vector<16x1xf32>
      %22 = arith.mulf %17, %17 : vector<16x32xf32>
      %cst_18 = arith.constant dense<0.000000e+00> : vector<16xf32>
      %23 = vector.multi_reduction <add>, %22, %cst_18 [1] : vector<16x32xf32> to vector<16xf32>
      %24 = vector.shape_cast %23 : vector<16xf32> to vector<16x1xf32>
      %cst_19 = arith.constant 3.200000e+01 : f32
      %25 = vector.broadcast %cst_19 : f32 to vector<16x1xf32>
      %26 = arith.divf %24, %25 : vector<16x1xf32>
      %27 = arith.mulf %21, %21 : vector<16x1xf32>
      %28 = arith.subf %26, %27 : vector<16x1xf32>
      %29 = vector.broadcast %21 : vector<16x1xf32> to vector<16x32xf32>
      %30 = arith.subf %17, %29 : vector<16x32xf32>
      %cst_20 = arith.constant 9.99999996E-13 : f32
      %31 = vector.broadcast %cst_20 : f32 to vector<16x1xf32>
      %32 = arith.addf %28, %31 : vector<16x1xf32>
      %33 = math.rsqrt %32 : vector<16x1xf32>
      %34 = vector.broadcast %33 : vector<16x1xf32> to vector<16x32xf32>
      %35 = arith.mulf %30, %34 : vector<16x32xf32>
      %c0_21 = arith.constant 0 : index
      %c0_22 = arith.constant 0 : index
      %36 = vector.load %arg6[%c0_21, %c0_22] : memref<1x32xf32, #tpu.memory_space<vmem>>, vector<1x32xf32>
      %37 = vector.broadcast %36 : vector<1x32xf32> to vector<16x32xf32>
      %38 = arith.mulf %35, %37 : vector<16x32xf32>
      %c0_23 = arith.constant 0 : index
      %c0_24 = arith.constant 0 : index
      %39 = vector.load %arg7[%c0_23, %c0_24] : memref<1x32xf32, #tpu.memory_space<vmem>>, vector<1x32xf32>
      %40 = vector.broadcast %39 : vector<1x32xf32> to vector<16x32xf32>
      %41 = arith.addf %38, %40 : vector<16x32xf32>
      %c0_25 = arith.constant 0 : index
      %c0_26 = arith.constant 0 : index
      %42 = vector.load %arg8[%c0_25, %c0_26] : memref<16x32xf32, #tpu.memory_space<vmem>>, vector<16x32xf32>
      tpu.vector_store %arg8[%c0_25, %c0_26], %41 {strides = array<i32>} : memref<16x32xf32, #tpu.memory_space<vmem>>, vector<16x32xf32>,
    } else {
    }
    return
  }
  func.func @transform_0(%arg0: i32, %arg1: i32) -> (i32, i32) {
    %c0_i32 = arith.constant 0 : i32
    return %arg0, %arg1 : i32, i32
  }
  func.func @transform_1(%arg0: i32, %arg1: i32) -> (i32, i32) {
    %c0_i32 = arith.constant 0 : i32
    %c0_i32_0 = arith.constant 0 : i32
    return %arg1, %c0_i32 : i32, i32
  }
  func.func @transform_2(%arg0: i32, %arg1: i32) -> (i32, i32) {
    %c0_i32 = arith.constant 0 : i32
    %c0_i32_0 = arith.constant 0 : i32
    %c0_i32_1 = arith.constant 0 : i32
    return %c0_i32, %c0_i32_0 : i32, i32
  }
  func.func @transform_3(%arg0: i32, %arg1: i32) -> (i32, i32) {
    %c0_i32 = arith.constant 0 : i32
    %c0_i32_0 = arith.constant 0 : i32
    return %arg0, %c0_i32 : i32, i32
  }
  func.func @transform_4(%arg0: i32, %arg1: i32) -> (i32, i32) {
    %c0_i32 = arith.constant 0 : i32
    %c0_i32_0 = arith.constant 0 : i32
    %c0_i32_1 = arith.constant 0 : i32
    return %c0_i32, %c0_i32_0 : i32, i32
  }
  func.func @transform_5(%arg0: i32, %arg1: i32) -> (i32, i32) {
    %c0_i32 = arith.constant 0 : i32
    %c0_i32_0 = arith.constant 0 : i32
    %c0_i32_1 = arith.constant 0 : i32
    return %c0_i32, %c0_i32_0 : i32, i32
  }
  func.func @transform_6(%arg0: i32, %arg1: i32) -> (i32, i32) {
    %c0_i32 = arith.constant 0 : i32
    %c0_i32_0 = arith.constant 0 : i32
    return %arg0, %c0_i32 : i32, i32
  }
}

</mosaic_0001>

<llo_original>
// kernel: tpu_custom_call.1
$region0: #{tpu_custom_call.1}
  #allocation0 [shape = 'u32[]', space=smem, size = 0x4, offset = 0x4, fixed_abs, tag = 'smem constant byte address 0x4 - core index']
  #allocation1 [shape = 'u32[144,128]{1,0:T(1,128)}', space=vmem, size = 0x12000, scoped, tag = 'internal scratch']
  #allocation2 [shape = 'f32[16,32]{1,0:T(8,128)}', space=vmem, size = 0x2000, scoped, tag = 'scratch operand']
  %s0 = inlined_call_operand.vmem [shape: f32[16,64], index: 0, kind: input, shape index: {}]
  %s1 = inlined_call_operand.vmem [shape: f32[64,32], index: 1, kind: input, shape index: {}]
  %s2 = inlined_call_operand.vmem [shape: f32[1,32], index: 2, kind: input, shape index: {}]
  %s3 = inlined_call_operand.vmem [shape: f32[16,32], index: 3, kind: input, shape index: {}]
  %s4 = inlined_call_operand.vmem [shape: f32[1,32], index: 4, kind: input, shape index: {}]
  %s5 = inlined_call_operand.vmem [shape: f32[1,32], index: 5, kind: input, shape index: {}]
  %s6 = inlined_call_operand.hbm [shape: f32[16,32], index: 6, kind: output, shape index: {}]
  %s7 = sld [smem:[#allocation0]]
  $region42: #{tpu_custom_call.1} parent=0
    _
  %s9 = ssub.s32 1, %s7
  %s10 = scalar_select 0, %s9, %s7
  $region1: #{tpu_custom_call.1} parent=0
    #allocation3 [shape = 'u8[8192]{0}', space=vmem, size = 0x2000, scoped, tag = 'output window, operand 0, single buffered']
    #allocation4 [shape = 's32[1]{0}', space=sflag, size = 0x4, scoped, tag = 'scoped memory for tpu_custom_call.1']
    %11 = vsyncpa [#allocation4], 0
    // Predicated region
    $region2: #{tpu_custom_call.1} parent=1 // pred_check
      _
    $region3: #{tpu_custom_call.1} parent=1 // pred_check_branch
      %13 = sbr.rel (0) target = $region5
    $region4: #{tpu_custom_call.1} parent=1 // pred_region
      _
    $region5: #{tpu_custom_call.1} parent=1 // pred_fallthru
      _
    // Predicated region
    $region6: #{tpu_custom_call.1} parent=1 // pred_check
      _
    $region7: #{tpu_custom_call.1} parent=1 // pred_check_branch
      %15 = sbr.rel (0) target = $region9
    $region8: #{tpu_custom_call.1} parent=1 // pred_region
      _
    $region9: #{tpu_custom_call.1} parent=1 // pred_fallthru
      _
    // Predicated region
    $region10: #{tpu_custom_call.1} parent=1 // pred_check
      _
    $region11: #{tpu_custom_call.1} parent=1 // pred_check_branch
      %17 = sbr.rel (0) target = $region13
    $region12: #{tpu_custom_call.1} parent=1 // pred_region
      _
    $region13: #{tpu_custom_call.1} parent=1 // pred_fallthru
      _
    // Predicated region
    $region14: #{tpu_custom_call.1} parent=1 // pred_check
      _
    $region15: #{tpu_custom_call.1} parent=1 // pred_check_branch
      %19 = sbr.rel (0) target = $region17
    $region16: #{tpu_custom_call.1} parent=1 // pred_region
      _
    $region17: #{tpu_custom_call.1} parent=1 // pred_fallthru
      _
    // Predicated region
    $region18: #{tpu_custom_call.1} parent=1 // pred_check
      _
    $region19: #{tpu_custom_call.1} parent=1 // pred_check_branch
      %21 = sbr.rel (0) target = $region21
    $region20: #{tpu_custom_call.1} parent=1 // pred_region
      _
    $region21: #{tpu_custom_call.1} parent=1 // pred_fallthru
      _
    // Predicated region
    $region22: #{tpu_custom_call.1} parent=1 // pred_check
      _
    $region23: #{tpu_custom_call.1} parent=1 // pred_check_branch
      %23 = sbr.rel (0) target = $region25
    $region24: #{tpu_custom_call.1} parent=1 // pred_region
      _
    $region25: #{tpu_custom_call.1} parent=1 // pred_fallthru
      _
    %p24 = scmp.eq.s32.totalorder 0, 0
    // Predicated region
    $region26: #{tpu_custom_call.1} parent=1 // pred_check
      %p25 = pneg %p24
    $region27: #{tpu_custom_call.1} parent=1 // pred_check_branch
      %27 = sbr.rel (%p25) target = $region29
    $region28: #{tpu_custom_call.1} parent=1 // pred_region
      %vm28 = vcmask 261120
      %29 = vst.msk [vmem:[#allocation2] sm:$0xff] %vm28, 0.0
      %30 = vst.msk [vmem:[#allocation2 + $0x8] sm:$0xff] %vm28, 0.0
    $region29: #{tpu_custom_call.1} parent=1 // pred_fallthru
      _
    %v31 = vld [vmem:[#allocation2] sm:$0xff]
    %v32 = vld [vmem:[#allocation2 + $0x8] sm:$0xff]
    %v33 = vld [vmem:[%s0] sm:$0xff]
    %v34 = vld [vmem:[%s0 + $0x8] sm:$0xff]
    %v35 = vld [vmem:[%s1] sm:$0xff]
    %v36 = vld [vmem:[%s1 + $0x8] sm:$0xff]
    %v37 = vld [vmem:[%s1 + $0x10] sm:$0xff]
    %v38 = vld [vmem:[%s1 + $0x18] sm:$0xff]
    %v39 = vld [vmem:[%s1 + $0x20] sm:$0xff]
    %v40 = vld [vmem:[%s1 + $0x28] sm:$0xff]
    %v41 = vld [vmem:[%s1 + $0x30] sm:$0xff]
    %v42 = vld [vmem:[%s1 + $0x38] sm:$0xff]
    %vm43 = vcmask 523264
    %v45 = vsel %vm43, %v33, 0
    %v48 = vsel %vm43, %v34, 0
    %50 = vmatprep.subr.mxu0 0.0
    %51 = vmatpush1.msra.mxu0 %v35
    %52 = vmatprep.subr.mxu0 0.0
    %53 = vmatpush1.msra.mxu0 %v36
    %54 = vmatprep.subr.mxu0 0.0
    %55 = vmatpush1.msra.mxu0 %v37
    %56 = vmatprep.subr.mxu0 0.0
    %57 = vmatpush1.msra.mxu0 %v38
    %58 = vmatprep.subr.mxu0 0.0
    %59 = vmatpush1.msra.mxu0 %v39
    %60 = vmatprep.subr.mxu0 0.0
    %61 = vmatpush1.msra.mxu0 %v40
    %62 = vmatprep.subr.mxu0 0.0
    %63 = vmatpush1.msra.mxu0 %v41
    %64 = vmatprep.subr.mxu0 0.0
    %65 = vmatpush1.msra.mxu0 %v42
    %66 = vmatprep.subr.mxu0 0.0
    %67 = vmatpush1.msra.mxu0 0.0
    %68 = vmatprep.subr.mxu0 0.0
    %69 = vmatpush1.msra.mxu0 0.0
    %70 = vmatprep.subr.mxu0 0.0
    %71 = vmatpush1.msra.mxu0 0.0
    %72 = vmatprep.subr.mxu0 0.0
    %73 = vmatpush1.msra.mxu0 0.0
    %74 = vmatprep.subr.mxu0 0.0
    %75 = vmatpush1.msra.mxu0 0.0
    %76 = vmatprep.subr.mxu0 0.0
    %77 = vmatpush1.msra.mxu0 0.0
    %78 = vmatprep.subr.mxu0 0.0
    %79 = vmatpush1.msra.mxu0 0.0
    %80 = vmatprep.subr.mxu0 0.0
    %81 = vmatpush1.msra.mxu0 0.0
    %82 = vmatprep.subr.mxu0 0.0
    %83 = vmatpush1.msra.mxu0 0.0
    %84 = vmatprep.subr.mxu0 0.0
    %85 = vmatpush1.msra.mxu0 0.0
    %86 = vmatprep.subr.mxu0 0.0
    %87 = vmatpush1.msra.mxu0 0.0
    %88 = vmatprep.subr.mxu0 0.0
    %89 = vmatpush1.msra.mxu0 0.0
    %90 = vmatprep.subr.mxu0 0.0
    %91 = vmatpush1.msra.mxu0 0.0
    %92 = vmatprep.subr.mxu0 0.0
    %93 = vmatpush1.msra.mxu0 0.0
    %94 = vmatprep.subr.mxu0 0.0
    %95 = vmatpush1.msra.mxu0 0.0
    %96 = vmatprep.subr.mxu0 0.0
    %97 = vmatpush1.msra.mxu0 0.0
    %98 = vmatprep.subr.mxu0 0.0
    %99 = vmatpush1.msra.mxu0 0.0
    %100 = vmatprep.subr.mxu0 0.0
    %101 = vmatpush1.msra.mxu0 0.0
    %102 = vmatprep.subr.mxu0 0.0
    %103 = vmatpush1.msra.mxu0 0.0
    %104 = vmatprep.subr.mxu0 0.0
    %105 = vmatpush1.msra.mxu0 0.0
    %106 = vmatprep.subr.mxu0 0.0
    %107 = vmatpush1.msra.mxu0 0.0
    %108 = vmatprep.subr.mxu0 0.0
    %109 = vmatpush1.msra.mxu0 0.0
    %110 = vmatprep.subr.mxu0 0.0
    %111 = vmatpush1.msra.mxu0 0.0
    %112 = vmatprep.subr.mxu0 0.0
    %113 = vmatpush1.msra.mxu0 0.0
    %114 = vmatprep.mubr.f32.mxu0 0.0
    %115 = vmatmul.mubr.f32.gmra.mrb[0].mxu0 %v45
    %v116 = vpop.f32.mrb[0].mxu0
    %v117 = vadd.f32 0.0, %v116
    %v118 = vpop.f32.mrb[0].mxu0
    %119 = vmatprep.mubr.f32.mxu0 0.0
    %120 = vmatmul.mubr.f32.gmra.mrb[0].mxu0 %v48
    %v121 = vpop.f32.mrb[0].mxu0
    %v122 = vadd.f32 0.0, %v121
    %v123 = vpop.f32.mrb[0].mxu0
    %124 = vdwg.mxu0
    %v125 = vadd.f32 %v31, %v117
    %v126 = vadd.f32 %v32, %v122
    %vm127 = vcmask 261120
    %128 = vst.msk [vmem:[#allocation2] sm:$0xff] %vm127, %v125
    %129 = vst.msk [vmem:[#allocation2 + $0x8] sm:$0xff] %vm127, %v126
    // Predicated region
    $region30: #{tpu_custom_call.1} parent=1 // pred_check
      %p130 = pneg %p24
    $region31: #{tpu_custom_call.1} parent=1 // pred_check_branch
      %132 = sbr.rel (%p130) target = $region33
    $region32: #{tpu_custom_call.1} parent=1 // pred_region
      %v133 = vld [vmem:[#allocation2] sm:$0xff]
      %v134 = vld [vmem:[#allocation2 + $0x8] sm:$0xff]
      %v135 = vld [vmem:[%s2] sm:$0x1]
      %v137 = vlaneseq
      %v138 = vshrl.u32 %v137, 7
      %v139 = vsub.s32 0, %v138
      %v140 = vrot.slane %v135, %v139
      %v142 = vadd.f32 %v133, %v140
      %v143 = vadd.f32 %v134, %v140
      %v144 = vld [vmem:[%s3] sm:$0xff]
      %v145 = vld [vmem:[%s3 + $0x8] sm:$0xff]
      %v146 = vadd.f32 %v142, %v144
      %v147 = vadd.f32 %v143, %v145
      %v148 = vsel %vm127, %v146, 0.0
      %149 = vadd.xlane.f32.xlu0 %v148
      %v150 = vpop.xlane.xlu0 %149
      %v151 = vsel %vm127, %v147, 0.0
      %152 = vadd.xlane.f32.xlu0 %v151
      %v153 = vpop.xlane.xlu0 %152
      %v154 = vrcp.pop 32.0
      %v155 = vmul.f32 %v150, %v154
      %v156 = vmul.f32 %v153, %v154
      %v157 = vmul.f32 %v146, %v146
      %v158 = vmul.f32 %v147, %v147
      %v159 = vsel %vm127, %v157, 0.0
      %160 = vadd.xlane.f32.xlu0 %v159
      %v161 = vpop.xlane.xlu0 %160
      %v162 = vsel %vm127, %v158, 0.0
      %163 = vadd.xlane.f32.xlu0 %v162
      %v164 = vpop.xlane.xlu0 %163
      %v165 = vmul.f32 %v161, %v154
      %v166 = vmul.f32 %v164, %v154
      %v167 = vmul.f32 %v155, %v155
      %v168 = vmul.f32 %v156, %v156
      %v169 = vsub.f32 %v165, %v167
      %v170 = vsub.f32 %v166, %v168
      %v171 = vsub.f32 %v146, %v155
      %v172 = vsub.f32 %v147, %v156
      %v173 = vadd.f32 %v169, 1e-12
      %v174 = vadd.f32 %v170, 1e-12
      %v175 = vrsqrt.pop %v173
      %v176 = vrsqrt.pop %v174
      %v177 = vmul.f32 %v171, %v175
      %v178 = vmul.f32 %v172, %v176
      %v179 = vld [vmem:[%s4] sm:$0x1]
      %v181 = vlaneseq
      %v182 = vshrl.u32 %v181, 7
      %v183 = vsub.s32 0, %v182
      %v184 = vrot.slane %v179, %v183
      %v186 = vmul.f32 %v177, %v184
      %v187 = vmul.f32 %v178, %v184
      %v188 = vld [vmem:[%s5] sm:$0x1]
      %v190 = vlaneseq
      %v191 = vshrl.u32 %v190, 7
      %v192 = vsub.s32 0, %v191
      %v193 = vrot.slane %v188, %v192
      %v195 = vadd.f32 %v186, %v193
      %v196 = vadd.f32 %v187, %v193
      %197 = vst.msk [vmem:[#allocation3] sm:$0xff] %vm127, %v195
      %198 = vst.msk [vmem:[#allocation3 + $0x8] sm:$0xff] %vm127, %v196
    $region33: #{tpu_custom_call.1} parent=1 // pred_fallthru
      _
    // Predicated region
    $region34: #{tpu_custom_call.1} parent=1 // pred_check
      _
    $region35: #{tpu_custom_call.1} parent=1 // pred_check_branch
      %200 = sbr.rel (0) target = $region37
    $region36: #{tpu_custom_call.1} parent=1 // pred_region
      %s202 = ssub.s32 256, 256
      %203 = vsyncadd [#allocation4], %s202
      %s204 = sshll.u32 [#allocation3], 4
      %s205 = int_to_ptr.vmem [resolvable:$true] %s204
      %210 = dma.vmem_to_hbm [thread:$0]  %s205, 256, %s6, [#allocation4], 128, 128, 8
    $region37: #{tpu_custom_call.1} parent=1 // pred_fallthru
      _
    // Predicated region
    $region38: #{tpu_custom_call.1} parent=1 // pred_check
      _
    $region39: #{tpu_custom_call.1} parent=1 // pred_check_branch
      %212 = sbr.rel (0) target = $region41
    $region40: #{tpu_custom_call.1} parent=1 // pred_region
      %213 = dma.done [#allocation4], 256
    $region41: #{tpu_custom_call.1} parent=1 // pred_fallthru
      _
    %214 = vsyncpa [#allocation4], 1

</llo_original>
